<compile_context>
chip_gen: v6e
topology: v6e:2x2x1
jax: 0.10.0
libtpu: 0.0.40
codegen_flags: <defaults>
</compile_context>

<pallas_src>
import jax
import jax.numpy as jnp
from jax import lax
from jax.experimental import pallas as pl
from jax.experimental.pallas import tpu as pltpu

HIDDEN = 10
CTRL = 3
HANDS_W = (2.0, 4.0, 6.0)   # fixed, bias-free Linear(3, 1) weights


def _round_up(n, m):
    return ((n + m - 1) // m) * m


def _make_kernel(chunk_rows, num_chunks):
    """Kernel over one (block_rows, lanes) slab, processed in vreg-sized chunks."""

    def kernel(w1_ref, b1_ref, w2_ref, b2_ref, x_ref, out_ref, ctrl_ref):
        # Hoist all SMEM scalar reads out of the chunk loop (loop-invariant sregs).
        w1 = [w1_ref[j] for j in range(HIDDEN)]
        b1 = [b1_ref[j] for j in range(HIDDEN)]
        w2 = [[w2_ref[k * HIDDEN + j] for j in range(HIDDEN)] for k in range(CTRL)]
        b2 = [b2_ref[k] for k in range(CTRL)]

        def compute(x):
            # Stream over the 10 hidden units, accumulating the 3 pre-activations,
            # so only ~6 chunk-sized values are live at once (stays in vregs).
            zs = [None] * CTRL
            for j in range(HIDDEN):
                h = jnp.maximum(w1[j] * x + b1[j], 0.0)          # VPU, scalar bcast
                for k in range(CTRL):
                    t = w2[k][j] * h
                    zs[k] = t if zs[k] is None else zs[k] + t
            # w2/b2 were pre-scaled by 0.5 on the host, so zs[k]+b2[k] == 0.5*z_k.
            ts = [jnp.tanh(zs[k] + b2[k]) for k in range(CTRL)]   # EUP slot
            ctrls = [0.5 * t + 0.5 for t in ts]                   # == sigmoid(z_k)
            # 2*c0 + 4*c1 + 6*c2 folded to t-space: fewer dependent VALU ops.
            out = ts[0] + 2.0 * ts[1] + 3.0 * ts[2] + 6.0
            return out, ctrls

        if num_chunks == 1:
            out, ctrls = compute(x_ref[...])
            out_ref[...] = out
            for k in range(CTRL):
                ctrl_ref[k] = ctrls[k]                            # lane-dense store
        else:
            def chunk_body(c, carry):
                r0 = pl.multiple_of(c * chunk_rows, chunk_rows)
                out, ctrls = compute(x_ref[pl.ds(r0, chunk_rows), :])
                out_ref[pl.ds(r0, chunk_rows), :] = out
                for k in range(CTRL):
                    ctrl_ref[k, pl.ds(r0, chunk_rows), :] = ctrls[k]
                return carry

            lax.fori_loop(0, num_chunks, chunk_body, 0,
                          unroll=True if num_chunks <= 8 else 8)

    return kernel


def motivation_nn(x, w1, b1, w2, b2, *, lanes=512, max_block_rows=512, chunk_rows=8):
    """x: (B, 1); w1: (10, 1); b1: (10,); w2: (3, 10); b2: (3,).

    Returns (output (B, 1), control (B, 3)) like the PyTorch module.
    """
    B = int(x.shape[0])
    rows_needed = max(1, -(-B // lanes))

    if rows_needed <= chunk_rows:
        # One full-array block (exempt from the (8,128) rule) -> minimal padding.
        block_rows = rows_needed
        rows = rows_needed
    else:
        # Cap block_rows so grid_n >= 2 (both v7x TensorCores get work), but keep
        # blocks big (>=1 MiB of x) to amortize per-step pipeline overhead.
        block_rows = min(max_block_rows,
                         _round_up(-(-rows_needed // 2), chunk_rows))
        rows = _round_up(rows_needed, block_rows)
    grid_n = rows // block_rows
    n = rows * lanes

    if block_rows % chunk_rows == 0:
        kernel_chunk, num_chunks = chunk_rows, block_rows // chunk_rows
    else:
        kernel_chunk, num_chunks = block_rows, 1

    # Batch -> dense lane-major slab via pad+reshape (no scatter pass over HBM).
    x_flat = x.reshape(-1).astype(jnp.float32)
    x_slab = jnp.pad(x_flat, (0, n - B)).reshape(rows, lanes)

    # Tiny params (33 floats) -> SMEM scalars. w2/b2 pre-scaled by 0.5 so the kernel
    # computes sigmoid(z) = 0.5*tanh(0.5 z) + 0.5 without a per-element 0.5*z mul.
    w1_s = w1.reshape(-1).astype(jnp.float32)           # (10,)  w1_s[j]        = W1[j,0]
    b1_s = b1.reshape(-1).astype(jnp.float32)           # (10,)
    w2_s = (0.5 * w2).reshape(-1).astype(jnp.float32)   # (30,)  w2_s[k*10 + j] = W2[k,j]/2
    b2_s = (0.5 * b2).reshape(-1).astype(jnp.float32)   # (3,)

    smem_spec = pl.BlockSpec(memory_space=pltpu.MemorySpace.SMEM)

    out_slab, ctrl_slab = pl.pallas_call(
        _make_kernel(kernel_chunk, num_chunks),
        out_shape=(
            jax.ShapeDtypeStruct((rows, lanes), jnp.float32),       # output slab
            jax.ShapeDtypeStruct((CTRL, rows, lanes), jnp.float32), # control slabs
        ),
        grid=(grid_n,),
        in_specs=[
            smem_spec,  # w1
            smem_spec,  # b1
            smem_spec,  # w2 (flattened, pre-scaled)
            smem_spec,  # b2 (pre-scaled)
            pl.BlockSpec((block_rows, lanes), lambda i: (i, 0)),    # x slab tile
        ],
        out_specs=(
            pl.BlockSpec((block_rows, lanes), lambda i: (i, 0)),
            pl.BlockSpec((CTRL, block_rows, lanes), lambda i: (0, i, 0)),
        ),
        compiler_params=pltpu.CompilerParams(
            dimension_semantics=("parallel",),      # shard batch tiles over v7x's 2 TCs
            vmem_limit_bytes=32 * 1024 * 1024,      # ~10 MiB used, explicit headroom
        ),
    )(w1_s, b1_s, w2_s, b2_s, x_slab)

    # Wrapper-side layout plumbing back to the public (B, 1) / (B, 3) API.
    # (If a downstream consumer can take control as (3, B), drop the .T below to
    #  save one narrow-minor-dim pass over HBM.)
    output = out_slab.reshape(-1)[:B].reshape(B, 1)
    control = ctrl_slab.reshape(CTRL, -1)[:, :B].T
    return output, control


def init_params():
    """Deterministic init mimicking nn.Linear defaults, in PyTorch-native shapes."""
    key = jax.random.PRNGKey(0)
    k1, k2, k3, k4 = jax.random.split(key, 4)
    lim1 = 1.0                              # Linear(1, 10): 1/sqrt(1)
    w1 = jax.random.uniform(k1, (HIDDEN, 1), jnp.float32, -lim1, lim1)
    b1 = jax.random.uniform(k2, (HIDDEN,), jnp.float32, -lim1, lim1)
    lim2 = 1.0 / jnp.sqrt(float(HIDDEN))    # Linear(10, 3)
    w2 = jax.random.uniform(k3, (CTRL, HIDDEN), jnp.float32, -lim2, lim2)
    b2 = jax.random.uniform(k4, (CTRL,), jnp.float32, -lim2, lim2)
    return w1, b1, w2, b2


def reference(x, w1, b1, w2, b2):
    """Pure-JAX reference (elementwise math only, to avoid low-precision XLA dots)."""
    h = jnp.maximum(x * w1.reshape(1, -1) + b1.reshape(1, -1), 0.0)      # (B, 10)
    z = jnp.sum(h[:, None, :] * w2[None, :, :], axis=-1) + b2[None, :]   # (B, 3)
    c = jax.nn.sigmoid(z)
    out = (HANDS_W[0] * c[:, 0] + HANDS_W[1] * c[:, 1]
           + HANDS_W[2] * c[:, 2]).reshape(-1, 1)
    return out, c


if __name__ == "__main__":
    params = init_params()
    key = jax.random.PRNGKey(0)

    # B=8: single tiny full-array block; B=1000: single (2,512) block;
    # B=20480: multi-tile grid (grid_n=2) with the chunked fori_loop path.
    for B in (8, 1000, 20480):
        x = jax.random.normal(jax.random.fold_in(key, B), (B, 1), jnp.float32)

        out, control = motivation_nn(x, *params)
        jax.block_until_ready((out, control))

        ref_out, ref_ctrl = reference(x, *params)
        assert out.shape == (B, 1) and control.shape == (B, 3)
        assert jnp.allclose(out, ref_out, atol=2e-4, rtol=2e-4)
        assert jnp.allclose(control, ref_ctrl, atol=2e-4, rtol=2e-4)

    print("KERNEL_OK")
</pallas_src>

<mosaic_0001>
module attributes {stable_mosaic.version = 11 : i64} {
  func.func @kernel(%arg0: i32, %arg1: memref<10xf32, #tpu.memory_space<smem>>, %arg2: memref<10xf32, #tpu.memory_space<smem>>, %arg3: memref<30xf32, #tpu.memory_space<smem>>, %arg4: memref<3xf32, #tpu.memory_space<smem>>, %arg5: memref<1x512xf32, #tpu.memory_space<vmem>>, %arg6: memref<1x512xf32, #tpu.memory_space<vmem>>, %arg7: memref<3x1x512xf32, #tpu.memory_space<vmem>>) attributes {dimension_semantics = [#tpu.dimension_semantics<parallel>], iteration_bounds = array<i64: 1>, scalar_prefetch = 0 : i64, scratch_operands = 0 : i64, tpu.core_type = #tpu.core_type<tc>, window_params = [{transform_indices = @transform_0, window_bounds = array<i64: 10>}, {transform_indices = @transform_1, window_bounds = array<i64: 10>}, {transform_indices = @transform_2, window_bounds = array<i64: 30>}, {transform_indices = @transform_3, window_bounds = array<i64: 3>}, {transform_indices = @transform_4, window_bounds = array<i64: 1, 512>}, {transform_indices = @transform_5, window_bounds = array<i64: 1, 512>}, {transform_indices = @transform_6, window_bounds = array<i64: 3, 1, 512>}]} {
    %c0 = arith.constant 0 : index
    %0 = memref.load %arg1[%c0] : memref<10xf32, #tpu.memory_space<smem>>
    %c1 = arith.constant 1 : index
    %1 = memref.load %arg1[%c1] : memref<10xf32, #tpu.memory_space<smem>>
    %c2 = arith.constant 2 : index
    %2 = memref.load %arg1[%c2] : memref<10xf32, #tpu.memory_space<smem>>
    %c3 = arith.constant 3 : index
    %3 = memref.load %arg1[%c3] : memref<10xf32, #tpu.memory_space<smem>>
    %c4 = arith.constant 4 : index
    %4 = memref.load %arg1[%c4] : memref<10xf32, #tpu.memory_space<smem>>
    %c5 = arith.constant 5 : index
    %5 = memref.load %arg1[%c5] : memref<10xf32, #tpu.memory_space<smem>>
    %c6 = arith.constant 6 : index
    %6 = memref.load %arg1[%c6] : memref<10xf32, #tpu.memory_space<smem>>
    %c7 = arith.constant 7 : index
    %7 = memref.load %arg1[%c7] : memref<10xf32, #tpu.memory_space<smem>>
    %c8 = arith.constant 8 : index
    %8 = memref.load %arg1[%c8] : memref<10xf32, #tpu.memory_space<smem>>
    %c9 = arith.constant 9 : index
    %9 = memref.load %arg1[%c9] : memref<10xf32, #tpu.memory_space<smem>>
    %c0_0 = arith.constant 0 : index
    %10 = memref.load %arg2[%c0_0] : memref<10xf32, #tpu.memory_space<smem>>
    %c1_1 = arith.constant 1 : index
    %11 = memref.load %arg2[%c1_1] : memref<10xf32, #tpu.memory_space<smem>>
    %c2_2 = arith.constant 2 : index
    %12 = memref.load %arg2[%c2_2] : memref<10xf32, #tpu.memory_space<smem>>
    %c3_3 = arith.constant 3 : index
    %13 = memref.load %arg2[%c3_3] : memref<10xf32, #tpu.memory_space<smem>>
    %c4_4 = arith.constant 4 : index
    %14 = memref.load %arg2[%c4_4] : memref<10xf32, #tpu.memory_space<smem>>
    %c5_5 = arith.constant 5 : index
    %15 = memref.load %arg2[%c5_5] : memref<10xf32, #tpu.memory_space<smem>>
    %c6_6 = arith.constant 6 : index
    %16 = memref.load %arg2[%c6_6] : memref<10xf32, #tpu.memory_space<smem>>
    %c7_7 = arith.constant 7 : index
    %17 = memref.load %arg2[%c7_7] : memref<10xf32, #tpu.memory_space<smem>>
    %c8_8 = arith.constant 8 : index
    %18 = memref.load %arg2[%c8_8] : memref<10xf32, #tpu.memory_space<smem>>
    %c9_9 = arith.constant 9 : index
    %19 = memref.load %arg2[%c9_9] : memref<10xf32, #tpu.memory_space<smem>>
    %c0_10 = arith.constant 0 : index
    %20 = memref.load %arg3[%c0_10] : memref<30xf32, #tpu.memory_space<smem>>
    %c1_11 = arith.constant 1 : index
    %21 = memref.load %arg3[%c1_11] : memref<30xf32, #tpu.memory_space<smem>>
    %c2_12 = arith.constant 2 : index
    %22 = memref.load %arg3[%c2_12] : memref<30xf32, #tpu.memory_space<smem>>
    %c3_13 = arith.constant 3 : index
    %23 = memref.load %arg3[%c3_13] : memref<30xf32, #tpu.memory_space<smem>>
    %c4_14 = arith.constant 4 : index
    %24 = memref.load %arg3[%c4_14] : memref<30xf32, #tpu.memory_space<smem>>
    %c5_15 = arith.constant 5 : index
    %25 = memref.load %arg3[%c5_15] : memref<30xf32, #tpu.memory_space<smem>>
    %c6_16 = arith.constant 6 : index
    %26 = memref.load %arg3[%c6_16] : memref<30xf32, #tpu.memory_space<smem>>
    %c7_17 = arith.constant 7 : index
    %27 = memref.load %arg3[%c7_17] : memref<30xf32, #tpu.memory_space<smem>>
    %c8_18 = arith.constant 8 : index
    %28 = memref.load %arg3[%c8_18] : memref<30xf32, #tpu.memory_space<smem>>
    %c9_19 = arith.constant 9 : index
    %29 = memref.load %arg3[%c9_19] : memref<30xf32, #tpu.memory_space<smem>>
    %c10 = arith.constant 10 : index
    %30 = memref.load %arg3[%c10] : memref<30xf32, #tpu.memory_space<smem>>
    %c11 = arith.constant 11 : index
    %31 = memref.load %arg3[%c11] : memref<30xf32, #tpu.memory_space<smem>>
    %c12 = arith.constant 12 : index
    %32 = memref.load %arg3[%c12] : memref<30xf32, #tpu.memory_space<smem>>
    %c13 = arith.constant 13 : index
    %33 = memref.load %arg3[%c13] : memref<30xf32, #tpu.memory_space<smem>>
    %c14 = arith.constant 14 : index
    %34 = memref.load %arg3[%c14] : memref<30xf32, #tpu.memory_space<smem>>
    %c15 = arith.constant 15 : index
    %35 = memref.load %arg3[%c15] : memref<30xf32, #tpu.memory_space<smem>>
    %c16 = arith.constant 16 : index
    %36 = memref.load %arg3[%c16] : memref<30xf32, #tpu.memory_space<smem>>
    %c17 = arith.constant 17 : index
    %37 = memref.load %arg3[%c17] : memref<30xf32, #tpu.memory_space<smem>>
    %c18 = arith.constant 18 : index
    %38 = memref.load %arg3[%c18] : memref<30xf32, #tpu.memory_space<smem>>
    %c19 = arith.constant 19 : index
    %39 = memref.load %arg3[%c19] : memref<30xf32, #tpu.memory_space<smem>>
    %c20 = arith.constant 20 : index
    %40 = memref.load %arg3[%c20] : memref<30xf32, #tpu.memory_space<smem>>
    %c21 = arith.constant 21 : index
    %41 = memref.load %arg3[%c21] : memref<30xf32, #tpu.memory_space<smem>>
    %c22 = arith.constant 22 : index
    %42 = memref.load %arg3[%c22] : memref<30xf32, #tpu.memory_space<smem>>
    %c23 = arith.constant 23 : index
    %43 = memref.load %arg3[%c23] : memref<30xf32, #tpu.memory_space<smem>>
    %c24 = arith.constant 24 : index
    %44 = memref.load %arg3[%c24] : memref<30xf32, #tpu.memory_space<smem>>
    %c25 = arith.constant 25 : index
    %45 = memref.load %arg3[%c25] : memref<30xf32, #tpu.memory_space<smem>>
    %c26 = arith.constant 26 : index
    %46 = memref.load %arg3[%c26] : memref<30xf32, #tpu.memory_space<smem>>
    %c27 = arith.constant 27 : index
    %47 = memref.load %arg3[%c27] : memref<30xf32, #tpu.memory_space<smem>>
    %c28 = arith.constant 28 : index
    %48 = memref.load %arg3[%c28] : memref<30xf32, #tpu.memory_space<smem>>
    %c29 = arith.constant 29 : index
    %49 = memref.load %arg3[%c29] : memref<30xf32, #tpu.memory_space<smem>>
    %c0_20 = arith.constant 0 : index
    %50 = memref.load %arg4[%c0_20] : memref<3xf32, #tpu.memory_space<smem>>
    %c1_21 = arith.constant 1 : index
    %51 = memref.load %arg4[%c1_21] : memref<3xf32, #tpu.memory_space<smem>>
    %c2_22 = arith.constant 2 : index
    %52 = memref.load %arg4[%c2_22] : memref<3xf32, #tpu.memory_space<smem>>
    %c0_23 = arith.constant 0 : index
    %c0_24 = arith.constant 0 : index
    %53 = vector.load %arg5[%c0_23, %c0_24] : memref<1x512xf32, #tpu.memory_space<vmem>>, vector<1x512xf32>
    %54 = vector.broadcast %0 : f32 to vector<1x512xf32>
    %55 = arith.mulf %54, %53 : vector<1x512xf32>
    %56 = vector.broadcast %10 : f32 to vector<1x512xf32>
    %57 = arith.addf %55, %56 : vector<1x512xf32>
    %cst = arith.constant 0.000000e+00 : f32
    %58 = vector.broadcast %cst : f32 to vector<1x512xf32>
    %59 = arith.maximumf %57, %58 : vector<1x512xf32>
    %60 = vector.broadcast %20 : f32 to vector<1x512xf32>
    %61 = arith.mulf %60, %59 : vector<1x512xf32>
    %62 = vector.broadcast %30 : f32 to vector<1x512xf32>
    %63 = arith.mulf %62, %59 : vector<1x512xf32>
    %64 = vector.broadcast %40 : f32 to vector<1x512xf32>
    %65 = arith.mulf %64, %59 : vector<1x512xf32>
    %66 = vector.broadcast %1 : f32 to vector<1x512xf32>
    %67 = arith.mulf %66, %53 : vector<1x512xf32>
    %68 = vector.broadcast %11 : f32 to vector<1x512xf32>
    %69 = arith.addf %67, %68 : vector<1x512xf32>
    %cst_25 = arith.constant 0.000000e+00 : f32
    %70 = vector.broadcast %cst_25 : f32 to vector<1x512xf32>
    %71 = arith.maximumf %69, %70 : vector<1x512xf32>
    %72 = vector.broadcast %21 : f32 to vector<1x512xf32>
    %73 = arith.mulf %72, %71 : vector<1x512xf32>
    %74 = arith.addf %61, %73 : vector<1x512xf32>
    %75 = vector.broadcast %31 : f32 to vector<1x512xf32>
    %76 = arith.mulf %75, %71 : vector<1x512xf32>
    %77 = arith.addf %63, %76 : vector<1x512xf32>
    %78 = vector.broadcast %41 : f32 to vector<1x512xf32>
    %79 = arith.mulf %78, %71 : vector<1x512xf32>
    %80 = arith.addf %65, %79 : vector<1x512xf32>
    %81 = vector.broadcast %2 : f32 to vector<1x512xf32>
    %82 = arith.mulf %81, %53 : vector<1x512xf32>
    %83 = vector.broadcast %12 : f32 to vector<1x512xf32>
    %84 = arith.addf %82, %83 : vector<1x512xf32>
    %cst_26 = arith.constant 0.000000e+00 : f32
    %85 = vector.broadcast %cst_26 : f32 to vector<1x512xf32>
    %86 = arith.maximumf %84, %85 : vector<1x512xf32>
    %87 = vector.broadcast %22 : f32 to vector<1x512xf32>
    %88 = arith.mulf %87, %86 : vector<1x512xf32>
    %89 = arith.addf %74, %88 : vector<1x512xf32>
    %90 = vector.broadcast %32 : f32 to vector<1x512xf32>
    %91 = arith.mulf %90, %86 : vector<1x512xf32>
    %92 = arith.addf %77, %91 : vector<1x512xf32>
    %93 = vector.broadcast %42 : f32 to vector<1x512xf32>
    %94 = arith.mulf %93, %86 : vector<1x512xf32>
    %95 = arith.addf %80, %94 : vector<1x512xf32>
    %96 = vector.broadcast %3 : f32 to vector<1x512xf32>
    %97 = arith.mulf %96, %53 : vector<1x512xf32>
    %98 = vector.broadcast %13 : f32 to vector<1x512xf32>
    %99 = arith.addf %97, %98 : vector<1x512xf32>
    %cst_27 = arith.constant 0.000000e+00 : f32
    %100 = vector.broadcast %cst_27 : f32 to vector<1x512xf32>
    %101 = arith.maximumf %99, %100 : vector<1x512xf32>
    %102 = vector.broadcast %23 : f32 to vector<1x512xf32>
    %103 = arith.mulf %102, %101 : vector<1x512xf32>
    %104 = arith.addf %89, %103 : vector<1x512xf32>
    %105 = vector.broadcast %33 : f32 to vector<1x512xf32>
    %106 = arith.mulf %105, %101 : vector<1x512xf32>
    %107 = arith.addf %92, %106 : vector<1x512xf32>
    %108 = vector.broadcast %43 : f32 to vector<1x512xf32>
    %109 = arith.mulf %108, %101 : vector<1x512xf32>
    %110 = arith.addf %95, %109 : vector<1x512xf32>
    %111 = vector.broadcast %4 : f32 to vector<1x512xf32>
    %112 = arith.mulf %111, %53 : vector<1x512xf32>
    %113 = vector.broadcast %14 : f32 to vector<1x512xf32>
    %114 = arith.addf %112, %113 : vector<1x512xf32>
    %cst_28 = arith.constant 0.000000e+00 : f32
    %115 = vector.broadcast %cst_28 : f32 to vector<1x512xf32>
    %116 = arith.maximumf %114, %115 : vector<1x512xf32>
    %117 = vector.broadcast %24 : f32 to vector<1x512xf32>
    %118 = arith.mulf %117, %116 : vector<1x512xf32>
    %119 = arith.addf %104, %118 : vector<1x512xf32>
    %120 = vector.broadcast %34 : f32 to vector<1x512xf32>
    %121 = arith.mulf %120, %116 : vector<1x512xf32>
    %122 = arith.addf %107, %121 : vector<1x512xf32>
    %123 = vector.broadcast %44 : f32 to vector<1x512xf32>
    %124 = arith.mulf %123, %116 : vector<1x512xf32>
    %125 = arith.addf %110, %124 : vector<1x512xf32>
    %126 = vector.broadcast %5 : f32 to vector<1x512xf32>
    %127 = arith.mulf %126, %53 : vector<1x512xf32>
    %128 = vector.broadcast %15 : f32 to vector<1x512xf32>
    %129 = arith.addf %127, %128 : vector<1x512xf32>
    %cst_29 = arith.constant 0.000000e+00 : f32
    %130 = vector.broadcast %cst_29 : f32 to vector<1x512xf32>
    %131 = arith.maximumf %129, %130 : vector<1x512xf32>
    %132 = vector.broadcast %25 : f32 to vector<1x512xf32>
    %133 = arith.mulf %132, %131 : vector<1x512xf32>
    %134 = arith.addf %119, %133 : vector<1x512xf32>
    %135 = vector.broadcast %35 : f32 to vector<1x512xf32>
    %136 = arith.mulf %135, %131 : vector<1x512xf32>
    %137 = arith.addf %122, %136 : vector<1x512xf32>
    %138 = vector.broadcast %45 : f32 to vector<1x512xf32>
    %139 = arith.mulf %138, %131 : vector<1x512xf32>
    %140 = arith.addf %125, %139 : vector<1x512xf32>
    %141 = vector.broadcast %6 : f32 to vector<1x512xf32>
    %142 = arith.mulf %141, %53 : vector<1x512xf32>
    %143 = vector.broadcast %16 : f32 to vector<1x512xf32>
    %144 = arith.addf %142, %143 : vector<1x512xf32>
    %cst_30 = arith.constant 0.000000e+00 : f32
    %145 = vector.broadcast %cst_30 : f32 to vector<1x512xf32>
    %146 = arith.maximumf %144, %145 : vector<1x512xf32>
    %147 = vector.broadcast %26 : f32 to vector<1x512xf32>
    %148 = arith.mulf %147, %146 : vector<1x512xf32>
    %149 = arith.addf %134, %148 : vector<1x512xf32>
    %150 = vector.broadcast %36 : f32 to vector<1x512xf32>
    %151 = arith.mulf %150, %146 : vector<1x512xf32>
    %152 = arith.addf %137, %151 : vector<1x512xf32>
    %153 = vector.broadcast %46 : f32 to vector<1x512xf32>
    %154 = arith.mulf %153, %146 : vector<1x512xf32>
    %155 = arith.addf %140, %154 : vector<1x512xf32>
    %156 = vector.broadcast %7 : f32 to vector<1x512xf32>
    %157 = arith.mulf %156, %53 : vector<1x512xf32>
    %158 = vector.broadcast %17 : f32 to vector<1x512xf32>
    %159 = arith.addf %157, %158 : vector<1x512xf32>
    %cst_31 = arith.constant 0.000000e+00 : f32
    %160 = vector.broadcast %cst_31 : f32 to vector<1x512xf32>
    %161 = arith.maximumf %159, %160 : vector<1x512xf32>
    %162 = vector.broadcast %27 : f32 to vector<1x512xf32>
    %163 = arith.mulf %162, %161 : vector<1x512xf32>
    %164 = arith.addf %149, %163 : vector<1x512xf32>
    %165 = vector.broadcast %37 : f32 to vector<1x512xf32>
    %166 = arith.mulf %165, %161 : vector<1x512xf32>
    %167 = arith.addf %152, %166 : vector<1x512xf32>
    %168 = vector.broadcast %47 : f32 to vector<1x512xf32>
    %169 = arith.mulf %168, %161 : vector<1x512xf32>
    %170 = arith.addf %155, %169 : vector<1x512xf32>
    %171 = vector.broadcast %8 : f32 to vector<1x512xf32>
    %172 = arith.mulf %171, %53 : vector<1x512xf32>
    %173 = vector.broadcast %18 : f32 to vector<1x512xf32>
    %174 = arith.addf %172, %173 : vector<1x512xf32>
    %cst_32 = arith.constant 0.000000e+00 : f32
    %175 = vector.broadcast %cst_32 : f32 to vector<1x512xf32>
    %176 = arith.maximumf %174, %175 : vector<1x512xf32>
    %177 = vector.broadcast %28 : f32 to vector<1x512xf32>
    %178 = arith.mulf %177, %176 : vector<1x512xf32>
    %179 = arith.addf %164, %178 : vector<1x512xf32>
    %180 = vector.broadcast %38 : f32 to vector<1x512xf32>
    %181 = arith.mulf %180, %176 : vector<1x512xf32>
    %182 = arith.addf %167, %181 : vector<1x512xf32>
    %183 = vector.broadcast %48 : f32 to vector<1x512xf32>
    %184 = arith.mulf %183, %176 : vector<1x512xf32>
    %185 = arith.addf %170, %184 : vector<1x512xf32>
    %186 = vector.broadcast %9 : f32 to vector<1x512xf32>
    %187 = arith.mulf %186, %53 : vector<1x512xf32>
    %188 = vector.broadcast %19 : f32 to vector<1x512xf32>
    %189 = arith.addf %187, %188 : vector<1x512xf32>
    %cst_33 = arith.constant 0.000000e+00 : f32
    %190 = vector.broadcast %cst_33 : f32 to vector<1x512xf32>
    %191 = arith.maximumf %189, %190 : vector<1x512xf32>
    %192 = vector.broadcast %29 : f32 to vector<1x512xf32>
    %193 = arith.mulf %192, %191 : vector<1x512xf32>
    %194 = arith.addf %179, %193 : vector<1x512xf32>
    %195 = vector.broadcast %39 : f32 to vector<1x512xf32>
    %196 = arith.mulf %195, %191 : vector<1x512xf32>
    %197 = arith.addf %182, %196 : vector<1x512xf32>
    %198 = vector.broadcast %49 : f32 to vector<1x512xf32>
    %199 = arith.mulf %198, %191 : vector<1x512xf32>
    %200 = arith.addf %185, %199 : vector<1x512xf32>
    %201 = vector.broadcast %50 : f32 to vector<1x512xf32>
    %202 = arith.addf %194, %201 : vector<1x512xf32>
    %203 = math.tanh %202 : vector<1x512xf32>
    %204 = vector.broadcast %51 : f32 to vector<1x512xf32>
    %205 = arith.addf %197, %204 : vector<1x512xf32>
    %206 = math.tanh %205 : vector<1x512xf32>
    %207 = vector.broadcast %52 : f32 to vector<1x512xf32>
    %208 = arith.addf %200, %207 : vector<1x512xf32>
    %209 = math.tanh %208 : vector<1x512xf32>
    %cst_34 = arith.constant 5.000000e-01 : f32
    %210 = vector.broadcast %cst_34 : f32 to vector<1x512xf32>
    %211 = arith.mulf %210, %203 : vector<1x512xf32>
    %cst_35 = arith.constant 5.000000e-01 : f32
    %212 = vector.broadcast %cst_35 : f32 to vector<1x512xf32>
    %213 = arith.addf %211, %212 : vector<1x512xf32>
    %cst_36 = arith.constant 5.000000e-01 : f32
    %214 = vector.broadcast %cst_36 : f32 to vector<1x512xf32>
    %215 = arith.mulf %214, %206 : vector<1x512xf32>
    %cst_37 = arith.constant 5.000000e-01 : f32
    %216 = vector.broadcast %cst_37 : f32 to vector<1x512xf32>
    %217 = arith.addf %215, %216 : vector<1x512xf32>
    %cst_38 = arith.constant 5.000000e-01 : f32
    %218 = vector.broadcast %cst_38 : f32 to vector<1x512xf32>
    %219 = arith.mulf %218, %209 : vector<1x512xf32>
    %cst_39 = arith.constant 5.000000e-01 : f32
    %220 = vector.broadcast %cst_39 : f32 to vector<1x512xf32>
    %221 = arith.addf %219, %220 : vector<1x512xf32>
    %cst_40 = arith.constant 2.000000e+00 : f32
    %222 = vector.broadcast %cst_40 : f32 to vector<1x512xf32>
    %223 = arith.mulf %222, %206 : vector<1x512xf32>
    %224 = arith.addf %203, %223 : vector<1x512xf32>
    %cst_41 = arith.constant 3.000000e+00 : f32
    %225 = vector.broadcast %cst_41 : f32 to vector<1x512xf32>
    %226 = arith.mulf %225, %209 : vector<1x512xf32>
    %227 = arith.addf %224, %226 : vector<1x512xf32>
    %cst_42 = arith.constant 6.000000e+00 : f32
    %228 = vector.broadcast %cst_42 : f32 to vector<1x512xf32>
    %229 = arith.addf %227, %228 : vector<1x512xf32>
    %c0_43 = arith.constant 0 : index
    %c0_44 = arith.constant 0 : index
    %230 = vector.load %arg6[%c0_43, %c0_44] : memref<1x512xf32, #tpu.memory_space<vmem>>, vector<1x512xf32>
    tpu.vector_store %arg6[%c0_43, %c0_44], %229 {strides = array<i32>} : memref<1x512xf32, #tpu.memory_space<vmem>>, vector<1x512xf32>,
    %c0_45 = arith.constant 0 : index
    %c0_46 = arith.constant 0 : index
    %c0_47 = arith.constant 0 : index
    %231 = vector.load %arg7[%c0_45, %c0_46, %c0_47] : memref<3x1x512xf32, #tpu.memory_space<vmem>>, vector<1x1x512xf32>
    %232 = vector.shape_cast %231 : vector<1x1x512xf32> to vector<1x512xf32>
    %233 = vector.shape_cast %213 : vector<1x512xf32> to vector<1x1x512xf32>
    tpu.vector_store %arg7[%c0_45, %c0_46, %c0_47], %233 {strides = array<i32>} : memref<3x1x512xf32, #tpu.memory_space<vmem>>, vector<1x1x512xf32>,
    %c1_48 = arith.constant 1 : index
    %c0_49 = arith.constant 0 : index
    %c0_50 = arith.constant 0 : index
    %234 = vector.load %arg7[%c1_48, %c0_49, %c0_50] : memref<3x1x512xf32, #tpu.memory_space<vmem>>, vector<1x1x512xf32>
    %235 = vector.shape_cast %234 : vector<1x1x512xf32> to vector<1x512xf32>
    %236 = vector.shape_cast %217 : vector<1x512xf32> to vector<1x1x512xf32>
    tpu.vector_store %arg7[%c1_48, %c0_49, %c0_50], %236 {strides = array<i32>} : memref<3x1x512xf32, #tpu.memory_space<vmem>>, vector<1x1x512xf32>,
    %c2_51 = arith.constant 2 : index
    %c0_52 = arith.constant 0 : index
    %c0_53 = arith.constant 0 : index
    %237 = vector.load %arg7[%c2_51, %c0_52, %c0_53] : memref<3x1x512xf32, #tpu.memory_space<vmem>>, vector<1x1x512xf32>
    %238 = vector.shape_cast %237 : vector<1x1x512xf32> to vector<1x512xf32>
    %239 = vector.shape_cast %221 : vector<1x512xf32> to vector<1x1x512xf32>
    tpu.vector_store %arg7[%c2_51, %c0_52, %c0_53], %239 {strides = array<i32>} : memref<3x1x512xf32, #tpu.memory_space<vmem>>, vector<1x1x512xf32>,
    return
  }
  func.func @transform_0(%arg0: i32) -> i32 {
    %c0_i32 = arith.constant 0 : i32
    %c0_i32_0 = arith.constant 0 : i32
    return %c0_i32 : i32
  }
  func.func @transform_1(%arg0: i32) -> i32 {
    %c0_i32 = arith.constant 0 : i32
    %c0_i32_0 = arith.constant 0 : i32
    return %c0_i32 : i32
  }
  func.func @transform_2(%arg0: i32) -> i32 {
    %c0_i32 = arith.constant 0 : i32
    %c0_i32_0 = arith.constant 0 : i32
    return %c0_i32 : i32
  }
  func.func @transform_3(%arg0: i32) -> i32 {
    %c0_i32 = arith.constant 0 : i32
    %c0_i32_0 = arith.constant 0 : i32
    return %c0_i32 : i32
  }
  func.func @transform_4(%arg0: i32) -> (i32, i32) {
    %c0_i32 = arith.constant 0 : i32
    %c0_i32_0 = arith.constant 0 : i32
    return %arg0, %c0_i32 : i32, i32
  }
  func.func @transform_5(%arg0: i32) -> (i32, i32) {
    %c0_i32 = arith.constant 0 : i32
    %c0_i32_0 = arith.constant 0 : i32
    return %arg0, %c0_i32 : i32, i32
  }
  func.func @transform_6(%arg0: i32) -> (i32, i32, i32) {
    %c0_i32 = arith.constant 0 : i32
    %c0_i32_0 = arith.constant 0 : i32
    %c0_i32_1 = arith.constant 0 : i32
    return %c0_i32, %arg0, %c0_i32_0 : i32, i32, i32
  }
}

</mosaic_0001>

<llo_original>
// kernel: tpu_custom_call.1
$region0: #{tpu_custom_call.1}
  #allocation0 [shape = 'u32[]', space=smem, size = 0x4, offset = 0x4, fixed_abs, tag = 'smem constant byte address 0x4 - core index']
  #allocation1 [shape = 'u32[144,128]{1,0:T(1,128)}', space=vmem, size = 0x12000, scoped, tag = 'internal scratch']
  %s0 = inlined_call_operand.hbm [shape: f32[10], index: 0, kind: input, shape index: {}]
  %s1 = inlined_call_operand.vmem [shape: f32[10], index: 1, kind: input, shape index: {}]
  %s2 = inlined_call_operand.vmem [shape: f32[30], index: 2, kind: input, shape index: {}]
  %s3 = inlined_call_operand.vmem [shape: f32[3], index: 3, kind: input, shape index: {}]
  %s4 = inlined_call_operand.vmem [shape: f32[1,512], index: 4, kind: input, shape index: {}]
  %s5 = inlined_call_operand.hbm [shape: f32[1,512], index: 5, kind: output, shape index: {0}]
  %s6 = inlined_call_operand.hbm [shape: f32[3,1,512], index: 6, kind: output, shape index: {1}]
  %7 = xla_tuple %s5, %s6
  %s8 = sld [smem:[#allocation0]]
  $region54: #{tpu_custom_call.1} parent=0
    _
  %s10 = ssub.s32 1, %s8
  %s11 = scalar_select 0, %s10, %s8
  $region1: #{tpu_custom_call.1} parent=0
    #allocation2 [shape = 'u8[512]{0}', space=smem, size = 0x200, scoped, tag = 'input window, operand 0, single buffered']
    #allocation3 [shape = 's32[1]{0}', space=sflag, size = 0x4, scoped, tag = 'scoped memory for tpu_custom_call.1']
    #allocation4 [shape = 's32[1]{0}', space=sflag, size = 0x4, scoped, tag = 'scoped memory for tpu_custom_call.1']
    #allocation5 [shape = 's32[1]{0}', space=sflag, size = 0x4, scoped, tag = 'scoped memory for tpu_custom_call.1']
    #allocation6 [shape = 'u8[512]{0}', space=smem, size = 0x200, scoped, tag = 'input window, operand 1, single buffered']
    #allocation7 [shape = 'u8[512]{0}', space=smem, size = 0x200, scoped, tag = 'input window, operand 2, single buffered']
    #allocation8 [shape = 's32[1]{0}', space=sflag, size = 0x4, scoped, tag = 'scoped memory for tpu_custom_call.1']
    #allocation9 [shape = 'u8[512]{0}', space=smem, size = 0x200, scoped, tag = 'input window, operand 3, single buffered']
    #allocation10 [shape = 'u8[2048]{0}', space=vmem, size = 0x800, scoped, tag = 'output window, operand 0, single buffered']
    #allocation11 [shape = 'u8[6144]{0}', space=vmem, size = 0x1800, scoped, tag = 'output window, operand 1, single buffered']
    #allocation12 [shape = 's32[1]{0}', space=sflag, size = 0x4, scoped, tag = 'scoped memory for tpu_custom_call.1']
    %12 = vsyncpa [#allocation4], 0
    %13 = vsyncpa [#allocation5], 0
    %14 = vsyncpa [#allocation8], 0
    %15 = vsyncpa [#allocation3], 0
    %16 = vsyncpa [#allocation12], 0
    // Predicated region
    $region2: #{tpu_custom_call.1} parent=1 // pred_check
      _
    $region3: #{tpu_custom_call.1} parent=1 // pred_check_branch
      %18 = sbr.rel (0) target = $region5
    $region4: #{tpu_custom_call.1} parent=1 // pred_region
      %s20 = ssub.s32 16, 16
      %21 = vsyncadd [#allocation4], %s20
      %24 = dma.hbm_to_smem %s0, 16, [#allocation2], [#allocation4]
    $region5: #{tpu_custom_call.1} parent=1 // pred_fallthru
      _
    // Predicated region
    $region6: #{tpu_custom_call.1} parent=1 // pred_check
      _
    $region7: #{tpu_custom_call.1} parent=1 // pred_check_branch
      %26 = sbr.rel (0) target = $region9
    $region8: #{tpu_custom_call.1} parent=1 // pred_region
      %s28 = ssub.s32 16, 16
      %29 = vsyncadd [#allocation5], %s28
      %s31 = sshll.u32 %s1, 4
      %s32 = int_to_ptr.vmem [resolvable:$true] %s31
      %34 = dma.vmem_to_smem %s32, 16, [#allocation6], [#allocation5]
    $region9: #{tpu_custom_call.1} parent=1 // pred_fallthru
      _
    // Predicated region
    $region10: #{tpu_custom_call.1} parent=1 // pred_check
      _
    $region11: #{tpu_custom_call.1} parent=1 // pred_check_branch
      %36 = sbr.rel (0) target = $region13
    $region12: #{tpu_custom_call.1} parent=1 // pred_region
      %s38 = ssub.s32 16, 16
      %39 = vsyncadd [#allocation8], %s38
      %s41 = sshll.u32 %s2, 4
      %s42 = int_to_ptr.vmem [resolvable:$true] %s41
      %44 = dma.vmem_to_smem %s42, 16, [#allocation7], [#allocation8]
    $region13: #{tpu_custom_call.1} parent=1 // pred_fallthru
      _
    // Predicated region
    $region14: #{tpu_custom_call.1} parent=1 // pred_check
      _
    $region15: #{tpu_custom_call.1} parent=1 // pred_check_branch
      %46 = sbr.rel (0) target = $region17
    $region16: #{tpu_custom_call.1} parent=1 // pred_region
      %s48 = ssub.s32 16, 16
      %49 = vsyncadd [#allocation8], %s48
      %s51 = sshll.u32 %s3, 4
      %s52 = int_to_ptr.vmem [resolvable:$true] %s51
      %54 = dma.vmem_to_smem %s52, 16, [#allocation9], [#allocation8]
    $region17: #{tpu_custom_call.1} parent=1 // pred_fallthru
      _
    // Predicated region
    $region18: #{tpu_custom_call.1} parent=1 // pred_check
      _
    $region19: #{tpu_custom_call.1} parent=1 // pred_check_branch
      %56 = sbr.rel (0) target = $region21
    $region20: #{tpu_custom_call.1} parent=1 // pred_region
      _
    $region21: #{tpu_custom_call.1} parent=1 // pred_fallthru
      _
    // Predicated region
    $region22: #{tpu_custom_call.1} parent=1 // pred_check
      _
    $region23: #{tpu_custom_call.1} parent=1 // pred_check_branch
      %58 = sbr.rel (0) target = $region25
    $region24: #{tpu_custom_call.1} parent=1 // pred_region
      %59 = dma.done [#allocation4], 16
    $region25: #{tpu_custom_call.1} parent=1 // pred_fallthru
      _
    // Predicated region
    $region26: #{tpu_custom_call.1} parent=1 // pred_check
      _
    $region27: #{tpu_custom_call.1} parent=1 // pred_check_branch
      %61 = sbr.rel (0) target = $region29
    $region28: #{tpu_custom_call.1} parent=1 // pred_region
      %62 = dma.done [#allocation5], 16
    $region29: #{tpu_custom_call.1} parent=1 // pred_fallthru
      _
    // Predicated region
    $region30: #{tpu_custom_call.1} parent=1 // pred_check
      _
    $region31: #{tpu_custom_call.1} parent=1 // pred_check_branch
      %64 = sbr.rel (0) target = $region33
    $region32: #{tpu_custom_call.1} parent=1 // pred_region
      %65 = dma.done [#allocation8], 16
    $region33: #{tpu_custom_call.1} parent=1 // pred_fallthru
      _
    // Predicated region
    $region34: #{tpu_custom_call.1} parent=1 // pred_check
      _
    $region35: #{tpu_custom_call.1} parent=1 // pred_check_branch
      %67 = sbr.rel (0) target = $region37
    $region36: #{tpu_custom_call.1} parent=1 // pred_region
      %68 = dma.done [#allocation8], 16
    $region37: #{tpu_custom_call.1} parent=1 // pred_fallthru
      _
    %69 = sfence
    %s70 = sld [smem:[#allocation2]]
    %s71 = sld [smem:[#allocation2 + $0x1]]
    %s72 = sld [smem:[#allocation2 + $0x2]]
    %s73 = sld [smem:[#allocation2 + $0x3]]
    %s74 = sld [smem:[#allocation2 + $0x4]]
    %s75 = sld [smem:[#allocation2 + $0x5]]
    %s76 = sld [smem:[#allocation2 + $0x6]]
    %s77 = sld [smem:[#allocation2 + $0x7]]
    %s78 = sld [smem:[#allocation2 + $0x8]]
    %s79 = sld [smem:[#allocation2 + $0x9]]
    %s80 = sld [smem:[#allocation6]]
    %s81 = sld [smem:[#allocation6 + $0x1]]
    %s82 = sld [smem:[#allocation6 + $0x2]]
    %s83 = sld [smem:[#allocation6 + $0x3]]
    %s84 = sld [smem:[#allocation6 + $0x4]]
    %s85 = sld [smem:[#allocation6 + $0x5]]
    %s86 = sld [smem:[#allocation6 + $0x6]]
    %s87 = sld [smem:[#allocation6 + $0x7]]
    %s88 = sld [smem:[#allocation6 + $0x8]]
    %s89 = sld [smem:[#allocation6 + $0x9]]
    %s90 = sld [smem:[#allocation7]]
    %s91 = sld [smem:[#allocation7 + $0x1]]
    %s92 = sld [smem:[#allocation7 + $0x2]]
    %s93 = sld [smem:[#allocation7 + $0x3]]
    %s94 = sld [smem:[#allocation7 + $0x4]]
    %s95 = sld [smem:[#allocation7 + $0x5]]
    %s96 = sld [smem:[#allocation7 + $0x6]]
    %s97 = sld [smem:[#allocation7 + $0x7]]
    %s98 = sld [smem:[#allocation7 + $0x8]]
    %s99 = sld [smem:[#allocation7 + $0x9]]
    %s100 = sld [smem:[#allocation7 + $0xa]]
    %s101 = sld [smem:[#allocation7 + $0xb]]
    %s102 = sld [smem:[#allocation7 + $0xc]]
    %s103 = sld [smem:[#allocation7 + $0xd]]
    %s104 = sld [smem:[#allocation7 + $0xe]]
    %s105 = sld [smem:[#allocation7 + $0xf]]
    %s106 = sld [smem:[#allocation7 + $0x10]]
    %s107 = sld [smem:[#allocation7 + $0x11]]
    %s108 = sld [smem:[#allocation7 + $0x12]]
    %s109 = sld [smem:[#allocation7 + $0x13]]
    %s110 = sld [smem:[#allocation7 + $0x14]]
    %s111 = sld [smem:[#allocation7 + $0x15]]
    %s112 = sld [smem:[#allocation7 + $0x16]]
    %s113 = sld [smem:[#allocation7 + $0x17]]
    %s114 = sld [smem:[#allocation7 + $0x18]]
    %s115 = sld [smem:[#allocation7 + $0x19]]
    %s116 = sld [smem:[#allocation7 + $0x1a]]
    %s117 = sld [smem:[#allocation7 + $0x1b]]
    %s118 = sld [smem:[#allocation7 + $0x1c]]
    %s119 = sld [smem:[#allocation7 + $0x1d]]
    %s120 = sld [smem:[#allocation9]]
    %s121 = sld [smem:[#allocation9 + $0x1]]
    %s122 = sld [smem:[#allocation9 + $0x2]]
    %v123 = vld [vmem:[%s4] sm:$0xf]
    %v124 = vstv %s70
    %v125 = vmul.f32 %v124, %v123
    %v126 = vstv %s80
    %v127 = vadd.f32 %v125, %v126
    %v128 = vmax.f32 %v127, 0.0
    %v129 = vstv %s90
    %v130 = vmul.f32 %v129, %v128
    %v131 = vstv %s100
    %v132 = vmul.f32 %v131, %v128
    %v133 = vstv %s110
    %v134 = vmul.f32 %v133, %v128
    %v135 = vstv %s71
    %v136 = vmul.f32 %v135, %v123
    %v137 = vstv %s81
    %v138 = vadd.f32 %v136, %v137
    %v139 = vmax.f32 %v138, 0.0
    %v140 = vstv %s91
    %v141 = vmul.f32 %v140, %v139
    %v142 = vadd.f32 %v130, %v141
    %v143 = vstv %s101
    %v144 = vmul.f32 %v143, %v139
    %v145 = vadd.f32 %v132, %v144
    %v146 = vstv %s111
    %v147 = vmul.f32 %v146, %v139
    %v148 = vadd.f32 %v134, %v147
    %v149 = vstv %s72
    %v150 = vmul.f32 %v149, %v123
    %v151 = vstv %s82
    %v152 = vadd.f32 %v150, %v151
    %v153 = vmax.f32 %v152, 0.0
    %v154 = vstv %s92
    %v155 = vmul.f32 %v154, %v153
    %v156 = vadd.f32 %v142, %v155
    %v157 = vstv %s102
    %v158 = vmul.f32 %v157, %v153
    %v159 = vadd.f32 %v145, %v158
    %v160 = vstv %s112
    %v161 = vmul.f32 %v160, %v153
    %v162 = vadd.f32 %v148, %v161
    %v163 = vstv %s73
    %v164 = vmul.f32 %v163, %v123
    %v165 = vstv %s83
    %v166 = vadd.f32 %v164, %v165
    %v167 = vmax.f32 %v166, 0.0
    %v168 = vstv %s93
    %v169 = vmul.f32 %v168, %v167
    %v170 = vadd.f32 %v156, %v169
    %v171 = vstv %s103
    %v172 = vmul.f32 %v171, %v167
    %v173 = vadd.f32 %v159, %v172
    %v174 = vstv %s113
    %v175 = vmul.f32 %v174, %v167
    %v176 = vadd.f32 %v162, %v175
    %v177 = vstv %s74
    %v178 = vmul.f32 %v177, %v123
    %v179 = vstv %s84
    %v180 = vadd.f32 %v178, %v179
    %v181 = vmax.f32 %v180, 0.0
    %v182 = vstv %s94
    %v183 = vmul.f32 %v182, %v181
    %v184 = vadd.f32 %v170, %v183
    %v185 = vstv %s104
    %v186 = vmul.f32 %v185, %v181
    %v187 = vadd.f32 %v173, %v186
    %v188 = vstv %s114
    %v189 = vmul.f32 %v188, %v181
    %v190 = vadd.f32 %v176, %v189
    %v191 = vstv %s75
    %v192 = vmul.f32 %v191, %v123
    %v193 = vstv %s85
    %v194 = vadd.f32 %v192, %v193
    %v195 = vmax.f32 %v194, 0.0
    %v196 = vstv %s95
    %v197 = vmul.f32 %v196, %v195
    %v198 = vadd.f32 %v184, %v197
    %v199 = vstv %s105
    %v200 = vmul.f32 %v199, %v195
    %v201 = vadd.f32 %v187, %v200
    %v202 = vstv %s115
    %v203 = vmul.f32 %v202, %v195
    %v204 = vadd.f32 %v190, %v203
    %v205 = vstv %s76
    %v206 = vmul.f32 %v205, %v123
    %v207 = vstv %s86
    %v208 = vadd.f32 %v206, %v207
    %v209 = vmax.f32 %v208, 0.0
    %v210 = vstv %s96
    %v211 = vmul.f32 %v210, %v209
    %v212 = vadd.f32 %v198, %v211
    %v213 = vstv %s106
    %v214 = vmul.f32 %v213, %v209
    %v215 = vadd.f32 %v201, %v214
    %v216 = vstv %s116
    %v217 = vmul.f32 %v216, %v209
    %v218 = vadd.f32 %v204, %v217
    %v219 = vstv %s77
    %v220 = vmul.f32 %v219, %v123
    %v221 = vstv %s87
    %v222 = vadd.f32 %v220, %v221
    %v223 = vmax.f32 %v222, 0.0
    %v224 = vstv %s97
    %v225 = vmul.f32 %v224, %v223
    %v226 = vadd.f32 %v212, %v225
    %v227 = vstv %s107
    %v228 = vmul.f32 %v227, %v223
    %v229 = vadd.f32 %v215, %v228
    %v230 = vstv %s117
    %v231 = vmul.f32 %v230, %v223
    %v232 = vadd.f32 %v218, %v231
    %v233 = vstv %s78
    %v234 = vmul.f32 %v233, %v123
    %v235 = vstv %s88
    %v236 = vadd.f32 %v234, %v235
    %v237 = vmax.f32 %v236, 0.0
    %v238 = vstv %s98
    %v239 = vmul.f32 %v238, %v237
    %v240 = vadd.f32 %v226, %v239
    %v241 = vstv %s108
    %v242 = vmul.f32 %v241, %v237
    %v243 = vadd.f32 %v229, %v242
    %v244 = vstv %s118
    %v245 = vmul.f32 %v244, %v237
    %v246 = vadd.f32 %v232, %v245
    %v247 = vstv %s79
    %v248 = vmul.f32 %v247, %v123
    %v249 = vstv %s89
    %v250 = vadd.f32 %v248, %v249
    %v251 = vmax.f32 %v250, 0.0
    %v252 = vstv %s99
    %v253 = vmul.f32 %v252, %v251
    %v254 = vadd.f32 %v240, %v253
    %v255 = vstv %s109
    %v256 = vmul.f32 %v255, %v251
    %v257 = vadd.f32 %v243, %v256
    %v258 = vstv %s119
    %v259 = vmul.f32 %v258, %v251
    %v260 = vadd.f32 %v246, %v259
    %v261 = vstv %s120
    %v262 = vadd.f32 %v254, %v261
    %v263 = vtanh.pop %v262
    %v264 = vstv %s121
    %v265 = vadd.f32 %v257, %v264
    %v266 = vtanh.pop %v265
    %v267 = vstv %s122
    %v268 = vadd.f32 %v260, %v267
    %v269 = vtanh.pop %v268
    %v270 = vmul.f32 %v263, 0.5
    %v271 = vadd.f32 %v270, 0.5
    %v272 = vmul.f32 %v266, 0.5
    %v273 = vadd.f32 %v272, 0.5
    %v274 = vmul.f32 %v269, 0.5
    %v275 = vadd.f32 %v274, 0.5
    %v276 = vmul.f32 %v266, 2.0
    %v277 = vadd.f32 %v263, %v276
    %v278 = vmul.f32 %v269, 3.0
    %v279 = vadd.f32 %v277, %v278
    %v280 = vadd.f32 %v279, 6.0
    %v281 = vlaneseq
    %vm282 = vcmp.ge.s32.totalorder %v281, 0
    %vm283 = vcmp.lt.s32.totalorder %v281, 512
    %vm284 = vmand %vm282, %vm283
    %285 = vst.msk [vmem:[#allocation10] sm:$0xf] %vm284, %v280
    %286 = vst.msk [vmem:[#allocation11] sm:$0xf] %vm284, %v271
    %s287 = scalar_lea.vmem [#allocation11], 4
    %288 = vst.msk [vmem:[%s287] sm:$0xf] %vm284, %v273
    %s289 = scalar_lea.vmem [#allocation11], 8
    %290 = vst.msk [vmem:[%s289] sm:$0xf] %vm284, %v275
    // Predicated region
    $region38: #{tpu_custom_call.1} parent=1 // pred_check
      _
    $region39: #{tpu_custom_call.1} parent=1 // pred_check_branch
      %292 = sbr.rel (0) target = $region41
    $region40: #{tpu_custom_call.1} parent=1 // pred_region
      %s294 = ssub.s32 64, 64
      %295 = vsyncadd [#allocation3], %s294
      %s297 = sshll.u32 [#allocation10], 4
      %s298 = int_to_ptr.vmem [resolvable:$true] %s297
      %300 = dma.vmem_to_hbm [thread:$0]  %s298, 64, %s5, [#allocation3]
    $region41: #{tpu_custom_call.1} parent=1 // pred_fallthru
      _
    // Predicated region
    $region42: #{tpu_custom_call.1} parent=1 // pred_check
      _
    $region43: #{tpu_custom_call.1} parent=1 // pred_check_branch
      %302 = sbr.rel (0) target = $region45
    $region44: #{tpu_custom_call.1} parent=1 // pred_region
      %s304 = ssub.s32 192, 192
      %305 = vsyncadd [#allocation12], %s304
      %s306 = sshll.u32 [#allocation11], 4
      %s307 = int_to_ptr.vmem [resolvable:$true] %s306
      %312 = dma.vmem_to_hbm [thread:$0]  %s307, 192, %s6, [#allocation12], 64, 64, 4
    $region45: #{tpu_custom_call.1} parent=1 // pred_fallthru
      _
    // Predicated region
    $region46: #{tpu_custom_call.1} parent=1 // pred_check
      _
    $region47: #{tpu_custom_call.1} parent=1 // pred_check_branch
      %314 = sbr.rel (0) target = $region49
    $region48: #{tpu_custom_call.1} parent=1 // pred_region
      %315 = dma.done [#allocation3], 64
    $region49: #{tpu_custom_call.1} parent=1 // pred_fallthru
      _
    // Predicated region
    $region50: #{tpu_custom_call.1} parent=1 // pred_check
      _
    $region51: #{tpu_custom_call.1} parent=1 // pred_check_branch
      %317 = sbr.rel (0) target = $region53
    $region52: #{tpu_custom_call.1} parent=1 // pred_region
      %318 = dma.done [#allocation12], 192
    $region53: #{tpu_custom_call.1} parent=1 // pred_fallthru
      _
    %319 = vsyncpa [#allocation3], 1
    %320 = vsyncpa [#allocation12], 1
    %321 = vsyncpa [#allocation4], 1
    %322 = vsyncpa [#allocation5], 1
    %323 = vsyncpa [#allocation8], 1

</llo_original>
